<compile_context>
chip_gen: v6e
topology: v6e:2x2x1
jax: 0.10.0
libtpu: 0.0.40
codegen_flags: <defaults>
</compile_context>

<pallas_src>
import functools

import jax
import jax.numpy as jnp
from jax.experimental import pallas as pl
from jax.experimental.pallas import tpu as pltpu


def _round_up(x, m):
    return (x + m - 1) // m * m


def _default_matmul_dtype():
    """bf16 MXU operands (f32 accumulation) on v6e/v7x, f32 elsewhere.

    f32 MXU operands are emulated with 3+ bf16 passes on recent TPUs, so bf16
    keeps the kernel HBM-bound instead of vmatmul-push-bound at large tiles.
    """
    try:
        kind = jax.devices()[0].device_kind.lower()
    except Exception:
        return jnp.float32
    if any(tag in kind for tag in ("v6", "v7", "7x")):
        return jnp.bfloat16
    return jnp.float32


def _tmodel_v1_kernel(beliefs_ref, pots_ref, w1t_ref, w1b_ref, b1_ref,
                      w2_ref, b2_ref, out_ref, *, matmul_dtype, fused):
    b = beliefs_ref[...]                                   # (TB, P)
    p = pots_ref[...]                                      # (TB, P)

    # Pairwise term kept in f32 regardless of input/matmul dtype.
    bp = b.astype(jnp.float32) * p.astype(jnp.float32)     # (TB, P)

    # Hidden layer: relu(cat([b, p]) @ W1 + b1) == relu(b@W1_top + p@W1_bot + b1)
    # (W1 pre-split in the wrapper: no in-kernel concat / unaligned row slice.)
    bm = b.astype(matmul_dtype)
    pm = p.astype(matmul_dtype)
    h = (jnp.dot(bm, w1t_ref[...], preferred_element_type=jnp.float32)
         + jnp.dot(pm, w1b_ref[...], preferred_element_type=jnp.float32)
         + b1_ref[...])                                    # (TB, Hp) f32
    h = jnp.maximum(h, 0.0)                                # ReLU

    if fused:
        # W1/b1/w2 were zero-padded to Hp == P columns in the wrapper, so the
        # T-MLP contribution per row is the row-sum of h*w2, and it folds
        # elementwise into the pairwise term.  A single 'ik,jk->ij'
        # contraction then yields the lane-dense (1, TB) output row directly
        # (one implicit activation transpose instead of two; batch stays on
        # the lane axis so the store below is one dense row).
        combined = bp + h * w2_ref[...]                    # (TB, P) f32
        ones_row = jnp.ones((1, combined.shape[1]), jnp.float32)
        out_row = jax.lax.dot_general(                     # (1, TB)
            ones_row, combined, (((1,), (1,)), ((), ())),
            preferred_element_type=jnp.float32)
    else:
        # Fallback (hidden width > num_pots): two contractions, as before.
        ones_row = jnp.ones((1, bp.shape[1]), jnp.float32)
        out_row = jax.lax.dot_general(
            ones_row, bp, (((1,), (1,)), ((), ())),
            preferred_element_type=jnp.float32)
        out_row = out_row + jax.lax.dot_general(
            w2_ref[...], h, (((1,), (1,)), ((), ())),
            preferred_element_type=jnp.float32)

    out_ref[...] = out_row + b2_ref[0]                     # dense (1, TB) store


def tmodel_v1_forward(beliefs, pots, w1, b1, w2, b2, *,
                      batch_tile=4096, matmul_dtype=None,
                      input_dtype=jnp.float32):
    """Fused TModelV1 forward. Returns shape (B,), matching the PyTorch module.

    batch_tile:   rows per grid step (default 4096, capped at 8192).  The tile
                  is further shrunk so that B > 128 always yields >= 2 grid
                  steps (keeps both v7x TensorCores busy via 'parallel').
    matmul_dtype: operand dtype of the W1 matmul (accumulation is always f32).
                  None = auto: bf16 on v6e/v7x, f32 otherwise.
    input_dtype:  dtype of beliefs/pots at the pallas_call boundary.  bf16
                  halves the dominant HBM read; validate tolerance first.
    """
    if matmul_dtype is None:
        matmul_dtype = _default_matmul_dtype()

    beliefs = jnp.asarray(beliefs, input_dtype)
    pots = jnp.asarray(pots, input_dtype)
    B, P = beliefs.shape
    H = w1.shape[1]
    assert w1.shape[0] == 2 * P

    # ---- weight prep (tiny; layout plumbing done once in XLA) ---------------
    fused = H <= P
    Hp = P if fused else H
    w1f = jnp.asarray(w1, jnp.float32)
    b1f = jnp.asarray(b1, jnp.float32).reshape(1, H)
    w2f = jnp.asarray(w2, jnp.float32).reshape(1, H)
    if fused and Hp != H:
        # Zero-pad hidden width to P so the reduction fuses into one contraction.
        w1f = jnp.pad(w1f, ((0, 0), (0, Hp - H)))
        b1f = jnp.pad(b1f, ((0, 0), (0, Hp - H)))
        w2f = jnp.pad(w2f, ((0, 0), (0, Hp - H)))
    w1_top = w1f[:P, :].astype(matmul_dtype)               # (P, Hp)
    w1_bot = w1f[P:, :].astype(matmul_dtype)               # (P, Hp)
    b2_s = jnp.asarray(b2, jnp.float32).reshape(1,)        # scalar -> SMEM

    # ---- batch tiling --------------------------------------------------------
    # Big tiles amortize the ~0.35us/step grid overhead; >=2 tiles whenever
    # B > 128 so the 'parallel' axis shards across both v7x TensorCores.
    batch_tile = max(128, min(int(batch_tile), 8192))
    if B <= 128:
        tile = _round_up(B, 8)                             # single full-extent tile
    else:
        half = _round_up(-(-B // 2), 128)                  # ceil(B/2), 128-aligned
        tile = min(_round_up(batch_tile, 128), half)
    B_pad = _round_up(B, tile)
    num_tiles = B_pad // tile
    if B_pad != B:                                         # pad, slice off at the end
        pad = B_pad - B
        beliefs = jnp.pad(beliefs, ((0, pad), (0, 0)))
        pots = jnp.pad(pots, ((0, pad), (0, 0)))

    # ---- explicit scoped-VMEM budget (lane-padded, double-buffered) ---------
    in_item = jnp.dtype(input_dtype).itemsize
    in_block = tile * 128 * in_item                        # (tile, P<=128) lane-padded
    out_block = 8 * _round_up(tile, 128) * 4               # (1, tile) sublane-padded
    vmem_limit = int(max(2 * 2 * in_block + 2 * out_block + (6 << 20), 32 << 20))

    kernel = functools.partial(_tmodel_v1_kernel,
                               matmul_dtype=matmul_dtype, fused=fused)

    out = pl.pallas_call(
        kernel,
        out_shape=jax.ShapeDtypeStruct((1, B_pad), jnp.float32),
        grid_spec=pltpu.PrefetchScalarGridSpec(
            num_scalar_prefetch=0,
            grid=(num_tiles,),
            in_specs=[
                pl.BlockSpec((tile, P), lambda i: (i, 0)),     # beliefs tile
                pl.BlockSpec((tile, P), lambda i: (i, 0)),     # pots tile
                pl.BlockSpec((P, Hp), lambda i: (0, 0)),       # W1_top (resident)
                pl.BlockSpec((P, Hp), lambda i: (0, 0)),       # W1_bot (resident)
                pl.BlockSpec((1, Hp), lambda i: (0, 0)),       # b1 row
                pl.BlockSpec((1, Hp), lambda i: (0, 0)),       # w2 row (padded)
                pl.BlockSpec(memory_space=pltpu.MemorySpace.SMEM),  # b2 scalar
            ],
            # Lane-dense output: batch on the lane axis -> dense (1, tile) stores.
            out_specs=pl.BlockSpec((1, tile), lambda i: (0, i)),
        ),
        compiler_params=pltpu.CompilerParams(
            dimension_semantics=("parallel",),
            vmem_limit_bytes=vmem_limit,
        ),
    )(beliefs, pots, w1_top, w1_bot, b1f, w2f, b2_s)

    return out.reshape(B_pad)[:B]


def reference_forward(beliefs, pots, w1, b1, w2, b2):
    """Plain-JAX reference, mirrors the PyTorch forward exactly."""
    x = jnp.concatenate([beliefs, pots], axis=1)
    h = jnp.maximum(x @ w1 + b1, 0.0)
    t_part = (h @ w2 + b2).squeeze()
    return (beliefs * pots).sum(axis=1) + t_part


if __name__ == "__main__":
    # Module-consistent shapes:
    #   num_nodes=4, num_vals=4, len(pairs)=2 -> num_pots = 4*4 + 4*4*2 = 48
    #   no_t_pots=False -> t_model input dim = 2*num_pots = 96, hidden H = 32
    num_nodes, num_vals, num_pairs = 4, 4, 2
    P = num_nodes * num_vals + num_vals * num_vals * num_pairs   # 48
    H = 32
    B = 256   # -> 2 grid steps of 128 rows (exercises the multi-tile path)

    key = jax.random.PRNGKey(0)
    k_b, k_p, k_w1, k_b1, k_w2, k_b2 = jax.random.split(key, 6)
    beliefs = jax.random.uniform(k_b, (B, P), dtype=jnp.float32)
    pots = jax.random.normal(k_p, (B, P), dtype=jnp.float32)
    w1 = jax.random.normal(k_w1, (2 * P, H), dtype=jnp.float32) * 0.1
    b1 = jax.random.normal(k_b1, (1, H), dtype=jnp.float32) * 0.01
    w2 = jax.random.normal(k_w2, (H, 1), dtype=jnp.float32) * 0.1
    b2 = jax.random.normal(k_b2, (1, 1), dtype=jnp.float32) * 0.01

    ref = reference_forward(beliefs, pots, w1, b1, w2, b2)

    # Tight correctness gate: explicit f32 matmul operands, f32 inputs.
    out = tmodel_v1_forward(beliefs, pots, w1, b1, w2, b2,
                            matmul_dtype=jnp.float32)
    out = jax.block_until_ready(out)
    assert out.shape == (B,)
    assert jnp.allclose(out, ref, atol=1e-5, rtol=1e-5)

    # Ragged batch (single full-extent tile, pad/clamp path), f32.
    Bs = 20
    out_s = tmodel_v1_forward(beliefs[:Bs], pots[:Bs], w1, b1, w2, b2,
                              matmul_dtype=jnp.float32)
    out_s = jax.block_until_ready(out_s)
    assert out_s.shape == (Bs,)
    assert jnp.allclose(out_s, ref[:Bs], atol=1e-5, rtol=1e-5)

    # Default path: bf16 W1-matmul operands auto-selected on v6e/v7x
    # (f32 accumulation; pairwise term stays f32).  Looser tolerance.
    out_d = tmodel_v1_forward(beliefs, pots, w1, b1, w2, b2)
    out_d = jax.block_until_ready(out_d)
    assert jnp.allclose(out_d, ref, atol=5e-2, rtol=5e-2)

    # Optional HBM-halving path: bf16 inputs at the pallas_call boundary.
    out_h = tmodel_v1_forward(beliefs, pots, w1, b1, w2, b2,
                              input_dtype=jnp.bfloat16)
    out_h = jax.block_until_ready(out_h)
    assert jnp.allclose(out_h, ref, atol=5e-2, rtol=5e-2)

    # TODO(synk): use_t_input=True passes an arbitrary user callable
    # t_model(beliefs, pots, inputs); only the default cat([beliefs, pots])
    # MLP path is fused here.  no_t_pots=True is the same kernel with the
    # pots half of W1 dropped.
    print("KERNEL_OK")
</pallas_src>

<mosaic_0001>
module attributes {stable_mosaic.version = 11 : i64} {
  func.func @_tmodel_v1_kernel(%arg0: i32, %arg1: memref<128x48xf32, #tpu.memory_space<vmem>>, %arg2: memref<128x48xf32, #tpu.memory_space<vmem>>, %arg3: memref<48x48xf32, #tpu.memory_space<vmem>>, %arg4: memref<48x48xf32, #tpu.memory_space<vmem>>, %arg5: memref<1x48xf32, #tpu.memory_space<vmem>>, %arg6: memref<1x48xf32, #tpu.memory_space<vmem>>, %arg7: memref<1xf32, #tpu.memory_space<smem>>, %arg8: memref<1x128xf32, #tpu.memory_space<vmem>>) attributes {dimension_semantics = [#tpu.dimension_semantics<parallel>], iteration_bounds = array<i64: 2>, scalar_prefetch = 0 : i64, scratch_operands = 0 : i64, tpu.core_type = #tpu.core_type<tc>, window_params = [{transform_indices = @transform_0, window_bounds = array<i64: 128, 48>}, {transform_indices = @transform_1, window_bounds = array<i64: 128, 48>}, {pipeline_mode = #tpu.pipeline_mode<synchronous>, transform_indices = @transform_2, window_bounds = array<i64: 48, 48>}, {pipeline_mode = #tpu.pipeline_mode<synchronous>, transform_indices = @transform_3, window_bounds = array<i64: 48, 48>}, {pipeline_mode = #tpu.pipeline_mode<synchronous>, transform_indices = @transform_4, window_bounds = array<i64: 1, 48>}, {pipeline_mode = #tpu.pipeline_mode<synchronous>, transform_indices = @transform_5, window_bounds = array<i64: 1, 48>}, {transform_indices = @transform_6, window_bounds = array<i64: 1>}, {transform_indices = @transform_7, window_bounds = array<i64: 1, 128>}]} {
    %c0 = arith.constant 0 : index
    %c0_0 = arith.constant 0 : index
    %0 = vector.load %arg1[%c0, %c0_0] : memref<128x48xf32, #tpu.memory_space<vmem>>, vector<128x48xf32>
    %c0_1 = arith.constant 0 : index
    %c0_2 = arith.constant 0 : index
    %1 = vector.load %arg2[%c0_1, %c0_2] : memref<128x48xf32, #tpu.memory_space<vmem>>, vector<128x48xf32>
    %2 = arith.mulf %0, %1 : vector<128x48xf32>
    %c0_3 = arith.constant 0 : index
    %c0_4 = arith.constant 0 : index
    %3 = vector.load %arg3[%c0_3, %c0_4] : memref<48x48xf32, #tpu.memory_space<vmem>>, vector<48x48xf32>
    %cst = arith.constant dense<0.000000e+00> : vector<128x48xf32>
    %4 = tpu.matmul %0, %3, %cst {dimension_numbers = #tpu.dot_dimension_numbers<[1], [0], [0], [1], [0, 0, 1, 1], [], []>} : vector<128x48xf32>, vector<48x48xf32>, vector<128x48xf32> -> vector<128x48xf32>
    %c0_5 = arith.constant 0 : index
    %c0_6 = arith.constant 0 : index
    %5 = vector.load %arg4[%c0_5, %c0_6] : memref<48x48xf32, #tpu.memory_space<vmem>>, vector<48x48xf32>
    %cst_7 = arith.constant dense<0.000000e+00> : vector<128x48xf32>
    %6 = tpu.matmul %1, %5, %cst_7 {dimension_numbers = #tpu.dot_dimension_numbers<[1], [0], [0], [1], [0, 0, 1, 1], [], []>} : vector<128x48xf32>, vector<48x48xf32>, vector<128x48xf32> -> vector<128x48xf32>
    %7 = arith.addf %4, %6 : vector<128x48xf32>
    %c0_8 = arith.constant 0 : index
    %c0_9 = arith.constant 0 : index
    %8 = vector.load %arg5[%c0_8, %c0_9] : memref<1x48xf32, #tpu.memory_space<vmem>>, vector<1x48xf32>
    %9 = vector.broadcast %8 : vector<1x48xf32> to vector<128x48xf32>
    %10 = arith.addf %7, %9 : vector<128x48xf32>
    %cst_10 = arith.constant 0.000000e+00 : f32
    %11 = vector.broadcast %cst_10 : f32 to vector<128x48xf32>
    %12 = arith.maximumf %10, %11 : vector<128x48xf32>
    %c0_11 = arith.constant 0 : index
    %c0_12 = arith.constant 0 : index
    %13 = vector.load %arg6[%c0_11, %c0_12] : memref<1x48xf32, #tpu.memory_space<vmem>>, vector<1x48xf32>
    %14 = vector.broadcast %13 : vector<1x48xf32> to vector<128x48xf32>
    %15 = arith.mulf %12, %14 : vector<128x48xf32>
    %16 = arith.addf %2, %15 : vector<128x48xf32>
    %cst_13 = arith.constant 1.000000e+00 : f32
    %17 = vector.broadcast %cst_13 : f32 to vector<1x48xf32>
    %cst_14 = arith.constant dense<0.000000e+00> : vector<1x128xf32>
    %18 = tpu.matmul %17, %16, %cst_14 {dimension_numbers = #tpu.dot_dimension_numbers<[1], [1], [0], [0], [0, 0, 1, 0], [], []>} : vector<1x48xf32>, vector<128x48xf32>, vector<1x128xf32> -> vector<1x128xf32>
    %c0_15 = arith.constant 0 : index
    %19 = memref.load %arg7[%c0_15] : memref<1xf32, #tpu.memory_space<smem>>
    %20 = vector.broadcast %19 : f32 to vector<1x128xf32>
    %21 = arith.addf %18, %20 : vector<1x128xf32>
    %c0_16 = arith.constant 0 : index
    %c0_17 = arith.constant 0 : index
    %22 = vector.load %arg8[%c0_16, %c0_17] : memref<1x128xf32, #tpu.memory_space<vmem>>, vector<1x128xf32>
    tpu.vector_store %arg8[%c0_16, %c0_17], %21 {strides = array<i32>} : memref<1x128xf32, #tpu.memory_space<vmem>>, vector<1x128xf32>,
    return
  }
  func.func @transform_0(%arg0: i32) -> (i32, i32) {
    %c0_i32 = arith.constant 0 : i32
    %c0_i32_0 = arith.constant 0 : i32
    return %arg0, %c0_i32 : i32, i32
  }
  func.func @transform_1(%arg0: i32) -> (i32, i32) {
    %c0_i32 = arith.constant 0 : i32
    %c0_i32_0 = arith.constant 0 : i32
    return %arg0, %c0_i32 : i32, i32
  }
  func.func @transform_2(%arg0: i32) -> (i32, i32) {
    %c0_i32 = arith.constant 0 : i32
    %c0_i32_0 = arith.constant 0 : i32
    %c0_i32_1 = arith.constant 0 : i32
    return %c0_i32, %c0_i32_0 : i32, i32
  }
  func.func @transform_3(%arg0: i32) -> (i32, i32) {
    %c0_i32 = arith.constant 0 : i32
    %c0_i32_0 = arith.constant 0 : i32
    %c0_i32_1 = arith.constant 0 : i32
    return %c0_i32, %c0_i32_0 : i32, i32
  }
  func.func @transform_4(%arg0: i32) -> (i32, i32) {
    %c0_i32 = arith.constant 0 : i32
    %c0_i32_0 = arith.constant 0 : i32
    %c0_i32_1 = arith.constant 0 : i32
    return %c0_i32, %c0_i32_0 : i32, i32
  }
  func.func @transform_5(%arg0: i32) -> (i32, i32) {
    %c0_i32 = arith.constant 0 : i32
    %c0_i32_0 = arith.constant 0 : i32
    %c0_i32_1 = arith.constant 0 : i32
    return %c0_i32, %c0_i32_0 : i32, i32
  }
  func.func @transform_6(%arg0: i32) -> i32 {
    %c0_i32 = arith.constant 0 : i32
    %c0_i32_0 = arith.constant 0 : i32
    return %c0_i32 : i32
  }
  func.func @transform_7(%arg0: i32) -> (i32, i32) {
    %c0_i32 = arith.constant 0 : i32
    %c0_i32_0 = arith.constant 0 : i32
    return %c0_i32, %arg0 : i32, i32
  }
}

</mosaic_0001>

<llo_original>
// kernel: tpu_custom_call.1
$region0: #{tpu_custom_call.1}
  #allocation0 [shape = 'u32[]', space=smem, size = 0x4, offset = 0x4, fixed_abs, tag = 'smem constant byte address 0x4 - core index']
  #allocation1 [shape = 'u32[144,128]{1,0:T(1,128)}', space=vmem, size = 0x12000, scoped, tag = 'internal scratch']
  #allocation2 [shape = 'f32[1]{0:T(128)S(6)}', space=smem, size = 0x200, scoped, tag = 'scoped memory for tpu_custom_call.1']
  %s0 = inlined_call_operand.vmem [shape: f32[256,48], index: 0, kind: input, shape index: {}]
  %s1 = inlined_call_operand.vmem [shape: f32[256,48], index: 1, kind: input, shape index: {}]
  %s2 = inlined_call_operand.vmem [shape: f32[48,48], index: 2, kind: input, shape index: {}]
  %s3 = inlined_call_operand.vmem [shape: f32[48,48], index: 3, kind: input, shape index: {}]
  %s4 = inlined_call_operand.vmem [shape: f32[1,48], index: 4, kind: input, shape index: {}]
  %s5 = inlined_call_operand.vmem [shape: f32[1,48], index: 5, kind: input, shape index: {}]
  %s6 = inlined_call_operand.<no memory space> [shape: f32[1], index: 6, kind: input, shape index: {}]
  %s7 = inlined_call_operand.hbm [shape: f32[1,256], index: 7, kind: output, shape index: {}]
  %s8 = sld [smem:[#allocation0]]
  $region61: #{tpu_custom_call.1} parent=0
    _
  %s10 = ssub.s32 1, %s8
  %s11 = scalar_select 0, %s10, %s8
  %12 = sst [smem:[#allocation2]] %s6
  $region1: #{tpu_custom_call.1} parent=0
    #allocation3 [shape = 'u8[1024]{0}', space=vmem, size = 0x400, scoped, tag = 'output window, operand 0']
    #allocation4 [shape = 's32[2]{0}', space=sflag, size = 0x8, scoped, tag = 'scoped memory for tpu_custom_call.1']
    %13 = vsyncpa [#allocation4], 0
    %s14 = scalar_lea.sflag [#allocation4], 1
    %15 = vsyncpa %s14, 0
    loop: start=0, step=1, limit=4
    $region2: #{tpu_custom_call.1} parent=1 // loop_pre_header
      _
    $region3: #{tpu_custom_call.1} parent=1 // loop_header
      %s17 = sphi 0, %s21
      %p18 = scmp.ge.s32.totalorder %s17, 4
      %s27 = sphi 0, %s29
      %s30 = sphi 0, %s27
      %s31 = sphi 0, %s30
      %s47 = sphi 0, %s31
      %s53 = sphi 0, %s55
      %s56 = sphi 0, %s53
      %s57 = sphi 0, %s56
      %s73 = sphi 0, %s57
      %s77 = sphi 0, %s77
      %s79 = sphi 0, %s77
      %s80 = sphi 0, %s79
      %s94 = sphi 0, %s80
      %s98 = sphi 0, %s98
      %s100 = sphi 0, %s98
      %s101 = sphi 0, %s100
      %s115 = sphi 0, %s101
      %s119 = sphi 0, %s119
      %s121 = sphi 0, %s119
      %s122 = sphi 0, %s121
      %s136 = sphi 0, %s122
      %s140 = sphi 0, %s140
      %s142 = sphi 0, %s140
      %s143 = sphi 0, %s142
      %s157 = sphi 0, %s143
      %s161 = sphi 0, %s161
      %s163 = sphi 0, %s161
      %s164 = sphi 0, %s163
      %s178 = sphi 0, %s164
      %s184 = sphi 0, %s186
      %s187 = sphi 0, %s184
      %s188 = sphi 0, %s187
      %s204 = sphi 0, %s188
    $region4: #{tpu_custom_call.1} parent=1 // loop_header_branch
      %20 = sbr.rel (%p18) target = $region8
    $region5: #{tpu_custom_call.1} parent=1 // loop_body
      %s22 = ssub.s32 %s17, 1
      %s23 = ssub.s32 %s17, 2
      %s24 = sadd.s32 %s17, 1
      %s25 = ssub.s32 %s17, %s24
      %p26 = scmp.eq.s32.totalorder %s25, 0
      %s28 = sadd.s32 %s27, 1
      %s29 = scalar_select %p26, %s27, %s28
      %p32 = pneg %p26
      %p33 = scmp.eq.s32.totalorder %s17, 1
      %p34 = por %p32, %p33
      %p35 = scmp.ne.s32.totalorder %s27, %s30
      %p36 = scmp.eq.s32.totalorder %s17, 0
      %p37 = por %p35, %p36
      %p38 = scmp.ne.s32.totalorder %s27, %s30
      %p39 = scmp.eq.s32.totalorder %s22, 1
      %p40 = por %p38, %p39
      %p41 = scmp.ne.s32.totalorder %s30, %s31
      %p42 = scmp.eq.s32.totalorder %s22, 0
      %p43 = por %p41, %p42
      %p44 = scmp.ne.s32.totalorder %s30, %s31
      %p45 = scmp.eq.s32.totalorder %s23, 1
      %p46 = por %p44, %p45
      %p48 = scmp.ne.s32.totalorder %s31, %s47
      %p49 = scmp.eq.s32.totalorder %s23, 0
      %p50 = por %p48, %p49
      %s51 = ssub.s32 %s17, %s24
      %p52 = scmp.eq.s32.totalorder %s51, 0
      %s54 = sadd.s32 %s53, 1
      %s55 = scalar_select %p52, %s53, %s54
      %p58 = pneg %p52
      %p59 = scmp.eq.s32.totalorder %s17, 1
      %p60 = por %p58, %p59
      %p61 = scmp.ne.s32.totalorder %s53, %s56
      %p62 = scmp.eq.s32.totalorder %s17, 0
      %p63 = por %p61, %p62
      %p64 = scmp.ne.s32.totalorder %s53, %s56
      %p65 = scmp.eq.s32.totalorder %s22, 1
      %p66 = por %p64, %p65
      %p67 = scmp.ne.s32.totalorder %s56, %s57
      %p68 = scmp.eq.s32.totalorder %s22, 0
      %p69 = por %p67, %p68
      %p70 = scmp.ne.s32.totalorder %s56, %s57
      %p71 = scmp.eq.s32.totalorder %s23, 1
      %p72 = por %p70, %p71
      %p74 = scmp.ne.s32.totalorder %s57, %s73
      %p75 = scmp.eq.s32.totalorder %s23, 0
      %p76 = por %p74, %p75
      %s78 = sadd.s32 %s77, 1
      %p81 = scmp.eq.s32.totalorder %s17, 1
      %p82 = scmp.ne.s32.totalorder %s77, %s79
      %p83 = scmp.eq.s32.totalorder %s17, 0
      %p84 = por %p82, %p83
      %p85 = scmp.ne.s32.totalorder %s77, %s79
      %p86 = scmp.eq.s32.totalorder %s22, 1
      %p87 = por %p85, %p86
      %p88 = scmp.ne.s32.totalorder %s79, %s80
      %p89 = scmp.eq.s32.totalorder %s22, 0
      %p90 = por %p88, %p89
      %p91 = scmp.ne.s32.totalorder %s79, %s80
      %p92 = scmp.eq.s32.totalorder %s23, 1
      %p93 = por %p91, %p92
      %p95 = scmp.ne.s32.totalorder %s80, %s94
      %p96 = scmp.eq.s32.totalorder %s23, 0
      %p97 = por %p95, %p96
      %s99 = sadd.s32 %s98, 1
      %p102 = scmp.eq.s32.totalorder %s17, 1
      %p103 = scmp.ne.s32.totalorder %s98, %s100
      %p104 = scmp.eq.s32.totalorder %s17, 0
      %p105 = por %p103, %p104
      %p106 = scmp.ne.s32.totalorder %s98, %s100
      %p107 = scmp.eq.s32.totalorder %s22, 1
      %p108 = por %p106, %p107
      %p109 = scmp.ne.s32.totalorder %s100, %s101
      %p110 = scmp.eq.s32.totalorder %s22, 0
      %p111 = por %p109, %p110
      %p112 = scmp.ne.s32.totalorder %s100, %s101
      %p113 = scmp.eq.s32.totalorder %s23, 1
      %p114 = por %p112, %p113
      %p116 = scmp.ne.s32.totalorder %s101, %s115
      %p117 = scmp.eq.s32.totalorder %s23, 0
      %p118 = por %p116, %p117
      %s120 = sadd.s32 %s119, 1
      %p123 = scmp.eq.s32.totalorder %s17, 1
      %p124 = scmp.ne.s32.totalorder %s119, %s121
      %p125 = scmp.eq.s32.totalorder %s17, 0
      %p126 = por %p124, %p125
      %p127 = scmp.ne.s32.totalorder %s119, %s121
      %p128 = scmp.eq.s32.totalorder %s22, 1
      %p129 = por %p127, %p128
      %p130 = scmp.ne.s32.totalorder %s121, %s122
      %p131 = scmp.eq.s32.totalorder %s22, 0
      %p132 = por %p130, %p131
      %p133 = scmp.ne.s32.totalorder %s121, %s122
      %p134 = scmp.eq.s32.totalorder %s23, 1
      %p135 = por %p133, %p134
      %p137 = scmp.ne.s32.totalorder %s122, %s136
      %p138 = scmp.eq.s32.totalorder %s23, 0
      %p139 = por %p137, %p138
      %s141 = sadd.s32 %s140, 1
      %p144 = scmp.eq.s32.totalorder %s17, 1
      %p145 = scmp.ne.s32.totalorder %s140, %s142
      %p146 = scmp.eq.s32.totalorder %s17, 0
      %p147 = por %p145, %p146
      %p148 = scmp.ne.s32.totalorder %s140, %s142
      %p149 = scmp.eq.s32.totalorder %s22, 1
      %p150 = por %p148, %p149
      %p151 = scmp.ne.s32.totalorder %s142, %s143
      %p152 = scmp.eq.s32.totalorder %s22, 0
      %p153 = por %p151, %p152
      %p154 = scmp.ne.s32.totalorder %s142, %s143
      %p155 = scmp.eq.s32.totalorder %s23, 1
      %p156 = por %p154, %p155
      %p158 = scmp.ne.s32.totalorder %s143, %s157
      %p159 = scmp.eq.s32.totalorder %s23, 0
      %p160 = por %p158, %p159
      %s162 = sadd.s32 %s161, 1
      %p165 = scmp.eq.s32.totalorder %s17, 1
      %p166 = scmp.ne.s32.totalorder %s161, %s163
      %p167 = scmp.eq.s32.totalorder %s17, 0
      %p168 = por %p166, %p167
      %p169 = scmp.ne.s32.totalorder %s161, %s163
      %p170 = scmp.eq.s32.totalorder %s22, 1
      %p171 = por %p169, %p170
      %p172 = scmp.ne.s32.totalorder %s163, %s164
      %p173 = scmp.eq.s32.totalorder %s22, 0
      %p174 = por %p172, %p173
      %p175 = scmp.ne.s32.totalorder %s163, %s164
      %p176 = scmp.eq.s32.totalorder %s23, 1
      %p177 = por %p175, %p176
      %p179 = scmp.ne.s32.totalorder %s164, %s178
      %p180 = scmp.eq.s32.totalorder %s23, 0
      %p181 = por %p179, %p180
      %s182 = ssub.s32 %s17, %s24
      %p183 = scmp.eq.s32.totalorder %s182, 0
      %s185 = sadd.s32 %s184, 1
      %s186 = scalar_select %p183, %s184, %s185
      %p189 = pneg %p183
      %p190 = scmp.eq.s32.totalorder %s17, 1
      %p191 = por %p189, %p190
      %p192 = scmp.ne.s32.totalorder %s184, %s187
      %p193 = scmp.eq.s32.totalorder %s17, 0
      %p194 = por %p192, %p193
      %p195 = scmp.ne.s32.totalorder %s184, %s187
      %p196 = scmp.eq.s32.totalorder %s22, 1
      %p197 = por %p195, %p196
      %p198 = scmp.ne.s32.totalorder %s187, %s188
      %p199 = scmp.eq.s32.totalorder %s22, 0
      %p200 = por %p198, %p199
      %p201 = scmp.ne.s32.totalorder %s187, %s188
      %p202 = scmp.eq.s32.totalorder %s23, 1
      %p203 = por %p201, %p202
      %p205 = scmp.ne.s32.totalorder %s188, %s204
      %p206 = scmp.eq.s32.totalorder %s23, 0
      %p207 = por %p205, %p206
      %p208 = scmp.le.s32.totalorder 1, %s17
      %p209 = scmp.lt.s32.totalorder %s17, 3
      %p210 = pnand %p208, %p209
      %p211 = pneg %p210
      // Predicated region
      $region9: #{tpu_custom_call.1} parent=5 // pred_check
        _
      $region10: #{tpu_custom_call.1} parent=5 // pred_check_branch
        %213 = sbr.rel (%p210) target = $region12
      $region11: #{tpu_custom_call.1} parent=5 // pred_region
        %s214 = ssub.s32 %s17, 1
        // Predicated region
        $region13: #{tpu_custom_call.1} parent=11 // pred_check
          %p215 = pneg %p90
        $region14: #{tpu_custom_call.1} parent=11 // pred_check_branch
          %217 = sbr.rel (%p215) target = $region16
        $region15: #{tpu_custom_call.1} parent=11 // pred_region
          _
        $region16: #{tpu_custom_call.1} parent=11 // pred_fallthru
          _
        // Predicated region
        $region17: #{tpu_custom_call.1} parent=11 // pred_check
          %p218 = pneg %p111
        $region18: #{tpu_custom_call.1} parent=11 // pred_check_branch
          %220 = sbr.rel (%p218) target = $region20
        $region19: #{tpu_custom_call.1} parent=11 // pred_region
          _
        $region20: #{tpu_custom_call.1} parent=11 // pred_fallthru
          _
        // Predicated region
        $region21: #{tpu_custom_call.1} parent=11 // pred_check
          %p221 = pneg %p132
        $region22: #{tpu_custom_call.1} parent=11 // pred_check_branch
          %223 = sbr.rel (%p221) target = $region24
        $region23: #{tpu_custom_call.1} parent=11 // pred_region
          _
        $region24: #{tpu_custom_call.1} parent=11 // pred_fallthru
          _
        // Predicated region
        $region25: #{tpu_custom_call.1} parent=11 // pred_check
          %p224 = pneg %p153
        $region26: #{tpu_custom_call.1} parent=11 // pred_check_branch
          %226 = sbr.rel (%p224) target = $region28
        $region27: #{tpu_custom_call.1} parent=11 // pred_region
          _
        $region28: #{tpu_custom_call.1} parent=11 // pred_fallthru
          _
        // Predicated region
        $region29: #{tpu_custom_call.1} parent=11 // pred_check
          %p227 = pneg %p174
        $region30: #{tpu_custom_call.1} parent=11 // pred_check_branch
          %229 = sbr.rel (%p227) target = $region32
        $region31: #{tpu_custom_call.1} parent=11 // pred_region
          _
        $region32: #{tpu_custom_call.1} parent=11 // pred_fallthru
          _
      $region12: #{tpu_custom_call.1} parent=5 // pred_fallthru
        _
      %p230 = scmp.lt.s32.totalorder %s17, 2
      // Predicated region
      $region33: #{tpu_custom_call.1} parent=5 // pred_check
        %p231 = pneg %p230
      $region34: #{tpu_custom_call.1} parent=5 // pred_check_branch
        %233 = sbr.rel (%p231) target = $region36
      $region35: #{tpu_custom_call.1} parent=5 // pred_region
        // Predicated region
        $region37: #{tpu_custom_call.1} parent=35 // pred_check
          %p234 = pneg %p37
        $region38: #{tpu_custom_call.1} parent=35 // pred_check_branch
          %236 = sbr.rel (%p234) target = $region40
        $region39: #{tpu_custom_call.1} parent=35 // pred_region
          %s237 = smul.u32 16, %s17
          %p238 = scmp.lt.s32.totalorder %s237, 31
          %s239 = scalar_select %p238, %s237, 31
          %s240 = smul.addr %s239, 8
          %s241 = scalar_lea.vmem %s0, %s240
          %s242 = smul.u32 16, %s17
        $region40: #{tpu_custom_call.1} parent=35 // pred_fallthru
          _
        // Predicated region
        $region41: #{tpu_custom_call.1} parent=35 // pred_check
          %p243 = pneg %p63
        $region42: #{tpu_custom_call.1} parent=35 // pred_check_branch
          %245 = sbr.rel (%p243) target = $region44
        $region43: #{tpu_custom_call.1} parent=35 // pred_region
          %s246 = smul.u32 16, %s17
          %p247 = scmp.lt.s32.totalorder %s246, 31
          %s248 = scalar_select %p247, %s246, 31
          %s249 = smul.addr %s248, 8
          %s250 = scalar_lea.vmem %s1, %s249
          %s251 = smul.u32 16, %s17
        $region44: #{tpu_custom_call.1} parent=35 // pred_fallthru
          _
      $region36: #{tpu_custom_call.1} parent=5 // pred_fallthru
        _
      %p252 = scmp.le.s32.totalorder 1, %s17
      %p253 = scmp.lt.s32.totalorder %s17, 3
      %p254 = pnand %p252, %p253
      %p255 = pneg %p254
      // Predicated region
      $region45: #{tpu_custom_call.1} parent=5 // pred_check
        _
      $region46: #{tpu_custom_call.1} parent=5 // pred_check_branch
        %257 = sbr.rel (%p254) target = $region48
      $region47: #{tpu_custom_call.1} parent=5 // pred_region
        %s258 = ssub.s32 %s17, 1
        %s259 = smul.u32 16, %s22
        %p260 = scmp.lt.s32.totalorder %s259, 31
        %s261 = scalar_select %p260, %s259, 31
        %s262 = smul.addr %s261, 8
        %s263 = scalar_lea.vmem %s0, %s262
        %p264 = pneg %p43
        %p265 = pneg %p40
        %s266 = smul.u32 16, %s22
        %p267 = scmp.lt.s32.totalorder %s266, 31
        %s268 = scalar_select %p267, %s266, 31
        %s269 = smul.addr %s268, 8
        %s270 = scalar_lea.vmem %s1, %s269
        %p271 = pneg %p69
        %p272 = pneg %p66
        %p273 = pneg %p90
        %p274 = pneg %p87
        %p275 = pneg %p111
        %p276 = pneg %p108
        %p277 = pneg %p132
        %p278 = pneg %p129
        %p279 = pneg %p153
        %p280 = pneg %p150
        %p281 = pneg %p174
        %p282 = pneg %p171
        %p283 = pneg %p200
        %p284 = pneg %p197
        %s285 = sand.u32 %s187, 1
        %s286 = scalar_lea.sflag [#allocation4], %s285
        %s287 = sand.u32 %s187, 1
        %s288 = scalar_lea.vmem [#allocation3], %s287
        %s289 = smul.u32 16, %s22
        %p290 = scmp.lt.s32.totalorder %s289, 31
        %s291 = scalar_select %p290, %s289, 31
        %s292 = smul.addr %s291, 8
        %s293 = scalar_lea.vmem %s0, %s292
        %s294 = smul.u32 16, %s22
        %s295 = smul.u32 16, %s22
        %p296 = scmp.lt.s32.totalorder %s295, 31
        %s297 = scalar_select %p296, %s295, 31
        %s298 = smul.addr %s297, 8
        %s299 = scalar_lea.vmem %s1, %s298
        %s300 = smul.u32 16, %s22
        %v301 = vld [vmem:[%s293] sm:$0xff]
        %v302 = vld [vmem:[%s293 + $0x8] sm:$0xff]
        %v303 = vld [vmem:[%s293 + $0x10] sm:$0xff]
        %v304 = vld [vmem:[%s293 + $0x18] sm:$0xff]
        %v305 = vld [vmem:[%s293 + $0x20] sm:$0xff]
        %v306 = vld [vmem:[%s293 + $0x28] sm:$0xff]
        %v307 = vld [vmem:[%s293 + $0x30] sm:$0xff]
        %v308 = vld [vmem:[%s293 + $0x38] sm:$0xff]
        %v309 = vld [vmem:[%s293 + $0x40] sm:$0xff]
        %v310 = vld [vmem:[%s293 + $0x48] sm:$0xff]
        %v311 = vld [vmem:[%s293 + $0x50] sm:$0xff]
        %v312 = vld [vmem:[%s293 + $0x58] sm:$0xff]
        %v313 = vld [vmem:[%s293 + $0x60] sm:$0xff]
        %v314 = vld [vmem:[%s293 + $0x68] sm:$0xff]
        %v315 = vld [vmem:[%s293 + $0x70] sm:$0xff]
        %v316 = vld [vmem:[%s293 + $0x78] sm:$0xff]
        %v317 = vld [vmem:[%s299] sm:$0xff]
        %v318 = vld [vmem:[%s299 + $0x8] sm:$0xff]
        %v319 = vld [vmem:[%s299 + $0x10] sm:$0xff]
        %v320 = vld [vmem:[%s299 + $0x18] sm:$0xff]
        %v321 = vld [vmem:[%s299 + $0x20] sm:$0xff]
        %v322 = vld [vmem:[%s299 + $0x28] sm:$0xff]
        %v323 = vld [vmem:[%s299 + $0x30] sm:$0xff]
        %v324 = vld [vmem:[%s299 + $0x38] sm:$0xff]
        %v325 = vld [vmem:[%s299 + $0x40] sm:$0xff]
        %v326 = vld [vmem:[%s299 + $0x48] sm:$0xff]
        %v327 = vld [vmem:[%s299 + $0x50] sm:$0xff]
        %v328 = vld [vmem:[%s299 + $0x58] sm:$0xff]
        %v329 = vld [vmem:[%s299 + $0x60] sm:$0xff]
        %v330 = vld [vmem:[%s299 + $0x68] sm:$0xff]
        %v331 = vld [vmem:[%s299 + $0x70] sm:$0xff]
        %v332 = vld [vmem:[%s299 + $0x78] sm:$0xff]
        %v333 = vmul.f32 %v301, %v317
        %v334 = vmul.f32 %v302, %v318
        %v335 = vmul.f32 %v303, %v319
        %v336 = vmul.f32 %v304, %v320
        %v337 = vmul.f32 %v305, %v321
        %v338 = vmul.f32 %v306, %v322
        %v339 = vmul.f32 %v307, %v323
        %v340 = vmul.f32 %v308, %v324
        %v341 = vmul.f32 %v309, %v325
        %v342 = vmul.f32 %v310, %v326
        %v343 = vmul.f32 %v311, %v327
        %v344 = vmul.f32 %v312, %v328
        %v345 = vmul.f32 %v313, %v329
        %v346 = vmul.f32 %v314, %v330
        %v347 = vmul.f32 %v315, %v331
        %v348 = vmul.f32 %v316, %v332
        %v349 = vld [vmem:[%s2] sm:$0xff]
        %v350 = vld [vmem:[%s2 + $0x8] sm:$0xff]
        %v351 = vld [vmem:[%s2 + $0x10] sm:$0xff]
        %v352 = vld [vmem:[%s2 + $0x18] sm:$0xff]
        %v353 = vld [vmem:[%s2 + $0x20] sm:$0xff]
        %v354 = vld [vmem:[%s2 + $0x28] sm:$0xff]
        %v355 = vld [vmem:[%s3] sm:$0xff]
        %v356 = vld [vmem:[%s3 + $0x8] sm:$0xff]
        %v357 = vld [vmem:[%s3 + $0x10] sm:$0xff]
        %v358 = vld [vmem:[%s3 + $0x18] sm:$0xff]
        %v359 = vld [vmem:[%s3 + $0x20] sm:$0xff]
        %v360 = vld [vmem:[%s3 + $0x28] sm:$0xff]
        %vm361 = vcmask 392192
        %v363 = vsel %vm361, %v317, 0
        %v366 = vsel %vm361, %v318, 0
        %v369 = vsel %vm361, %v319, 0
        %v372 = vsel %vm361, %v320, 0
        %v375 = vsel %vm361, %v321, 0
        %v378 = vsel %vm361, %v322, 0
        %v381 = vsel %vm361, %v323, 0
        %v384 = vsel %vm361, %v324, 0
        %v387 = vsel %vm361, %v325, 0
        %v390 = vsel %vm361, %v326, 0
        %v393 = vsel %vm361, %v327, 0
        %v396 = vsel %vm361, %v328, 0
        %v399 = vsel %vm361, %v329, 0
        %v402 = vsel %vm361, %v330, 0
        %v405 = vsel %vm361, %v331, 0
        %v408 = vsel %vm361, %v332, 0
        %410 = vmatprep.subr.mxu0 0.0
        %411 = vmatpush1.msra.mxu0 0.0
        %412 = vmatprep.subr.mxu0 0.0
        %413 = vmatpush1.msra.mxu0 0.0
        %414 = vmatprep.subr.mxu0 0.0
        %415 = vmatpush1.msra.mxu0 0.0
        %416 = vmatprep.subr.mxu0 0.0
        %417 = vmatpush1.msra.mxu0 0.0
        %418 = vmatprep.subr.mxu0 0.0
        %419 = vmatpush1.msra.mxu0 0.0
        %420 = vmatprep.subr.mxu0 0.0
        %421 = vmatpush1.msra.mxu0 0.0
        %422 = vmatprep.subr.mxu0 0.0
        %423 = vmatpush1.msra.mxu0 0.0
        %424 = vmatprep.subr.mxu0 0.0
        %425 = vmatpush1.msra.mxu0 0.0
        %426 = vmatprep.subr.mxu0 0.0
        %427 = vmatpush1.msra.mxu0 0.0
        %428 = vmatprep.subr.mxu0 0.0
        %429 = vmatpush1.msra.mxu0 0.0
        %430 = vmatprep.subr.mxu0 0.0
        %431 = vmatpush1.msra.mxu0 %v360
        %432 = vmatprep.subr.mxu0 0.0
        %433 = vmatpush1.msra.mxu0 %v359
        %434 = vmatprep.subr.mxu0 0.0
        %435 = vmatpush1.msra.mxu0 %v358
        %436 = vmatprep.subr.mxu0 0.0
        %437 = vmatpush1.msra.mxu0 %v357
        %438 = vmatprep.subr.mxu0 0.0
        %439 = vmatpush1.msra.mxu0 %v356
        %440 = vmatprep.subr.mxu0 0.0
        %441 = vmatpush1.msra.mxu0 %v355
        %442 = vmatprep.subr.mxu0 0.0
        %443 = vmatpush2.msra.mxu0 0.0
        %444 = vmatprep.subr.mxu0 0.0
        %445 = vmatpush2.msra.mxu0 0.0
        %446 = vmatprep.subr.mxu0 0.0
        %447 = vmatpush2.msra.mxu0 0.0
        %448 = vmatprep.subr.mxu0 0.0
        %449 = vmatpush2.msra.mxu0 0.0
        %450 = vmatprep.subr.mxu0 0.0
        %451 = vmatpush2.msra.mxu0 0.0
        %452 = vmatprep.subr.mxu0 0.0
        %453 = vmatpush2.msra.mxu0 0.0
        %454 = vmatprep.subr.mxu0 0.0
        %455 = vmatpush2.msra.mxu0 0.0
        %456 = vmatprep.subr.mxu0 0.0
        %457 = vmatpush2.msra.mxu0 0.0
        %458 = vmatprep.subr.mxu0 0.0
        %459 = vmatpush2.msra.mxu0 0.0
        %460 = vmatprep.subr.mxu0 0.0
        %461 = vmatpush2.msra.mxu0 0.0
        %462 = vmatprep.subr.mxu0 0.0
        %463 = vmatpush2.msra.mxu0 0.0
        %464 = vmatprep.subr.mxu0 0.0
        %465 = vmatpush2.msra.mxu0 0.0
        %466 = vmatprep.subr.mxu0 0.0
        %467 = vmatpush2.msra.mxu0 0.0
        %468 = vmatprep.subr.mxu0 0.0
        %469 = vmatpush2.msra.mxu0 0.0
        %470 = vmatprep.subr.mxu0 0.0
        %471 = vmatpush2.msra.mxu0 0.0
        %472 = vmatprep.subr.mxu0 0.0
        %473 = vmatpush2.msra.mxu0 0.0
        %474 = vmatprep.mubr.f32.mxu0 0.0
        %475 = vmatmul.mubr.f32.gmra.mxu0 %v363
        %v476 = vpop.f32.mrf.mxu0
        %v477 = vadd.f32 0.0, %v476
        %v478 = vpop.f32.mrf.mxu0
        %479 = vmatprep.mubr.f32.mxu0 0.0
        %480 = vmatmul.mubr.f32.gmra.mxu0 %v366
        %v481 = vpop.f32.mrf.mxu0
        %v482 = vadd.f32 0.0, %v481
        %v483 = vpop.f32.mrf.mxu0
        %484 = vmatprep.mubr.f32.mxu0 0.0
        %485 = vmatmul.mubr.f32.gmra.mxu0 %v369
        %v486 = vpop.f32.mrf.mxu0
        %v487 = vadd.f32 0.0, %v486
        %v488 = vpop.f32.mrf.mxu0
        %489 = vmatprep.mubr.f32.mxu0 0.0
        %490 = vmatmul.mubr.f32.gmra.mxu0 %v372
        %v491 = vpop.f32.mrf.mxu0
        %v492 = vadd.f32 0.0, %v491
        %v493 = vpop.f32.mrf.mxu0
        %494 = vmatprep.mubr.f32.mxu0 0.0
        %495 = vmatmul.mubr.f32.gmra.mxu0 %v375
        %v496 = vpop.f32.mrf.mxu0
        %v497 = vadd.f32 0.0, %v496
        %v498 = vpop.f32.mrf.mxu0
        %499 = vmatprep.mubr.f32.mxu0 0.0
        %500 = vmatmul.mubr.f32.gmra.mxu0 %v378
        %v501 = vpop.f32.mrf.mxu0
        %v502 = vadd.f32 0.0, %v501
        %v503 = vpop.f32.mrf.mxu0
        %504 = vmatprep.mubr.f32.mxu0 0.0
        %505 = vmatmul.mubr.f32.gmra.mxu0 %v381
        %v506 = vpop.f32.mrf.mxu0
        %v507 = vadd.f32 0.0, %v506
        %v508 = vpop.f32.mrf.mxu0
        %509 = vmatprep.mubr.f32.mxu0 0.0
        %510 = vmatmul.mubr.f32.gmra.mxu0 %v384
        %v511 = vpop.f32.mrf.mxu0
        %v512 = vadd.f32 0.0, %v511
        %v513 = vpop.f32.mrf.mxu0
        %514 = vmatprep.mubr.f32.mxu0 0.0
        %515 = vmatmul.mubr.f32.gmra.mxu0 %v387
        %v516 = vpop.f32.mrf.mxu0
        %v517 = vadd.f32 0.0, %v516
        %v518 = vpop.f32.mrf.mxu0
        %519 = vmatprep.mubr.f32.mxu0 0.0
        %520 = vmatmul.mubr.f32.gmra.mxu0 %v390
        %v521 = vpop.f32.mrf.mxu0
        %v522 = vadd.f32 0.0, %v521
        %v523 = vpop.f32.mrf.mxu0
        %524 = vmatprep.mubr.f32.mxu0 0.0
        %525 = vmatmul.mubr.f32.gmra.mxu0 %v393
        %v526 = vpop.f32.mrf.mxu0
        %v527 = vadd.f32 0.0, %v526
        %v528 = vpop.f32.mrf.mxu0
        %529 = vmatprep.mubr.f32.mxu0 0.0
        %530 = vmatmul.mubr.f32.gmra.mxu0 %v396
        %v531 = vpop.f32.mrf.mxu0
        %v532 = vadd.f32 0.0, %v531
        %v533 = vpop.f32.mrf.mxu0
        %534 = vmatprep.mubr.f32.mxu0 0.0
        %535 = vmatmul.mubr.f32.gmra.mxu0 %v399
        %v536 = vpop.f32.mrf.mxu0
        %v537 = vadd.f32 0.0, %v536
        %v538 = vpop.f32.mrf.mxu0
        %539 = vmatprep.mubr.f32.mxu0 0.0
        %540 = vmatmul.mubr.f32.gmra.mxu0 %v402
        %v541 = vpop.f32.mrf.mxu0
        %v542 = vadd.f32 0.0, %v541
        %v543 = vpop.f32.mrf.mxu0
        %544 = vmatprep.mubr.f32.mxu0 0.0
        %545 = vmatmul.mubr.f32.gmra.mxu0 %v405
        %v546 = vpop.f32.mrf.mxu0
        %v547 = vadd.f32 0.0, %v546
        %v548 = vpop.f32.mrf.mxu0
        %549 = vmatprep.mubr.f32.mxu0 0.0
        %550 = vmatmul.mubr.f32.gmra.mxu0 %v408
        %v551 = vpop.f32.mrf.mxu0
        %v552 = vadd.f32 0.0, %v551
        %v553 = vpop.f32.mrf.mxu0
        %554 = vdwg.mxu0
        %v556 = vsel %vm361, %v301, 0
        %v559 = vsel %vm361, %v302, 0
        %v562 = vsel %vm361, %v303, 0
        %v565 = vsel %vm361, %v304, 0
        %v568 = vsel %vm361, %v305, 0
        %v571 = vsel %vm361, %v306, 0
        %v574 = vsel %vm361, %v307, 0
        %v577 = vsel %vm361, %v308, 0
        %v580 = vsel %vm361, %v309, 0
        %v583 = vsel %vm361, %v310, 0
        %v586 = vsel %vm361, %v311, 0
        %v589 = vsel %vm361, %v312, 0
        %v592 = vsel %vm361, %v313, 0
        %v595 = vsel %vm361, %v314, 0
        %v598 = vsel %vm361, %v315, 0
        %v601 = vsel %vm361, %v316, 0
        %603 = vmatprep.subr.mxu0 0.0
        %604 = vmatpush1.msra.mxu0 0.0
        %605 = vmatprep.subr.mxu0 0.0
        %606 = vmatpush1.msra.mxu0 0.0
        %607 = vmatprep.subr.mxu0 0.0
        %608 = vmatpush1.msra.mxu0 0.0
        %609 = vmatprep.subr.mxu0 0.0
        %610 = vmatpush1.msra.mxu0 0.0
        %611 = vmatprep.subr.mxu0 0.0
        %612 = vmatpush1.msra.mxu0 0.0
        %613 = vmatprep.subr.mxu0 0.0
        %614 = vmatpush1.msra.mxu0 0.0
        %615 = vmatprep.subr.mxu0 0.0
        %616 = vmatpush1.msra.mxu0 0.0
        %617 = vmatprep.subr.mxu0 0.0
        %618 = vmatpush1.msra.mxu0 0.0
        %619 = vmatprep.subr.mxu0 0.0
        %620 = vmatpush1.msra.mxu0 0.0
        %621 = vmatprep.subr.mxu0 0.0
        %622 = vmatpush1.msra.mxu0 0.0
        %623 = vmatprep.subr.mxu0 0.0
        %624 = vmatpush1.msra.mxu0 %v354
        %625 = vmatprep.subr.mxu0 0.0
        %626 = vmatpush1.msra.mxu0 %v353
        %627 = vmatprep.subr.mxu0 0.0
        %628 = vmatpush1.msra.mxu0 %v352
        %629 = vmatprep.subr.mxu0 0.0
        %630 = vmatpush1.msra.mxu0 %v351
        %631 = vmatprep.subr.mxu0 0.0
        %632 = vmatpush1.msra.mxu0 %v350
        %633 = vmatprep.subr.mxu0 0.0
        %634 = vmatpush1.msra.mxu0 %v349
        %635 = vmatprep.subr.mxu0 0.0
        %636 = vmatpush2.msra.mxu0 0.0
        %637 = vmatprep.subr.mxu0 0.0
        %638 = vmatpush2.msra.mxu0 0.0
        %639 = vmatprep.subr.mxu0 0.0
        %640 = vmatpush2.msra.mxu0 0.0
        %641 = vmatprep.subr.mxu0 0.0
        %642 = vmatpush2.msra.mxu0 0.0
        %643 = vmatprep.subr.mxu0 0.0
        %644 = vmatpush2.msra.mxu0 0.0
        %645 = vmatprep.subr.mxu0 0.0
        %646 = vmatpush2.msra.mxu0 0.0
        %647 = vmatprep.subr.mxu0 0.0
        %648 = vmatpush2.msra.mxu0 0.0
        %649 = vmatprep.subr.mxu0 0.0
        %650 = vmatpush2.msra.mxu0 0.0
        %651 = vmatprep.subr.mxu0 0.0
        %652 = vmatpush2.msra.mxu0 0.0
        %653 = vmatprep.subr.mxu0 0.0
        %654 = vmatpush2.msra.mxu0 0.0
        %655 = vmatprep.subr.mxu0 0.0
        %656 = vmatpush2.msra.mxu0 0.0
        %657 = vmatprep.subr.mxu0 0.0
        %658 = vmatpush2.msra.mxu0 0.0
        %659 = vmatprep.subr.mxu0 0.0
        %660 = vmatpush2.msra.mxu0 0.0
        %661 = vmatprep.subr.mxu0 0.0
        %662 = vmatpush2.msra.mxu0 0.0
        %663 = vmatprep.subr.mxu0 0.0
        %664 = vmatpush2.msra.mxu0 0.0
        %665 = vmatprep.subr.mxu0 0.0
        %666 = vmatpush2.msra.mxu0 0.0
        %667 = vmatprep.mubr.f32.mxu0 0.0
        %668 = vmatmul.mubr.f32.gmra.mxu0 %v556
        %v669 = vpop.f32.mrf.mxu0
        %v670 = vadd.f32 %v477, %v669
        %v671 = vpop.f32.mrf.mxu0
        %672 = vmatprep.mubr.f32.mxu0 0.0
        %673 = vmatmul.mubr.f32.gmra.mxu0 %v559
        %v674 = vpop.f32.mrf.mxu0
        %v675 = vadd.f32 %v482, %v674
        %v676 = vpop.f32.mrf.mxu0
        %677 = vmatprep.mubr.f32.mxu0 0.0
        %678 = vmatmul.mubr.f32.gmra.mxu0 %v562
        %v679 = vpop.f32.mrf.mxu0
        %v680 = vadd.f32 %v487, %v679
        %v681 = vpop.f32.mrf.mxu0
        %682 = vmatprep.mubr.f32.mxu0 0.0
        %683 = vmatmul.mubr.f32.gmra.mxu0 %v565
        %v684 = vpop.f32.mrf.mxu0
        %v685 = vadd.f32 %v492, %v684
        %v686 = vpop.f32.mrf.mxu0
        %687 = vmatprep.mubr.f32.mxu0 0.0
        %688 = vmatmul.mubr.f32.gmra.mxu0 %v568
        %v689 = vpop.f32.mrf.mxu0
        %v690 = vadd.f32 %v497, %v689
        %v691 = vpop.f32.mrf.mxu0
        %692 = vmatprep.mubr.f32.mxu0 0.0
        %693 = vmatmul.mubr.f32.gmra.mxu0 %v571
        %v694 = vpop.f32.mrf.mxu0
        %v695 = vadd.f32 %v502, %v694
        %v696 = vpop.f32.mrf.mxu0
        %697 = vmatprep.mubr.f32.mxu0 0.0
        %698 = vmatmul.mubr.f32.gmra.mxu0 %v574
        %v699 = vpop.f32.mrf.mxu0
        %v700 = vadd.f32 %v507, %v699
        %v701 = vpop.f32.mrf.mxu0
        %702 = vmatprep.mubr.f32.mxu0 0.0
        %703 = vmatmul.mubr.f32.gmra.mxu0 %v577
        %v704 = vpop.f32.mrf.mxu0
        %v705 = vadd.f32 %v512, %v704
        %v706 = vpop.f32.mrf.mxu0
        %707 = vmatprep.mubr.f32.mxu0 0.0
        %708 = vmatmul.mubr.f32.gmra.mxu0 %v580
        %v709 = vpop.f32.mrf.mxu0
        %v710 = vadd.f32 %v517, %v709
        %v711 = vpop.f32.mrf.mxu0
        %712 = vmatprep.mubr.f32.mxu0 0.0
        %713 = vmatmul.mubr.f32.gmra.mxu0 %v583
        %v714 = vpop.f32.mrf.mxu0
        %v715 = vadd.f32 %v522, %v714
        %v716 = vpop.f32.mrf.mxu0
        %717 = vmatprep.mubr.f32.mxu0 0.0
        %718 = vmatmul.mubr.f32.gmra.mxu0 %v586
        %v719 = vpop.f32.mrf.mxu0
        %v720 = vadd.f32 %v527, %v719
        %v721 = vpop.f32.mrf.mxu0
        %722 = vmatprep.mubr.f32.mxu0 0.0
        %723 = vmatmul.mubr.f32.gmra.mxu0 %v589
        %v724 = vpop.f32.mrf.mxu0
        %v725 = vadd.f32 %v532, %v724
        %v726 = vpop.f32.mrf.mxu0
        %727 = vmatprep.mubr.f32.mxu0 0.0
        %728 = vmatmul.mubr.f32.gmra.mxu0 %v592
        %v729 = vpop.f32.mrf.mxu0
        %v730 = vadd.f32 %v537, %v729
        %v731 = vpop.f32.mrf.mxu0
        %732 = vmatprep.mubr.f32.mxu0 0.0
        %733 = vmatmul.mubr.f32.gmra.mxu0 %v595
        %v734 = vpop.f32.mrf.mxu0
        %v735 = vadd.f32 %v542, %v734
        %v736 = vpop.f32.mrf.mxu0
        %737 = vmatprep.mubr.f32.mxu0 0.0
        %738 = vmatmul.mubr.f32.gmra.mxu0 %v598
        %v739 = vpop.f32.mrf.mxu0
        %v740 = vadd.f32 %v547, %v739
        %v741 = vpop.f32.mrf.mxu0
        %742 = vmatprep.mubr.f32.mxu0 0.0
        %743 = vmatmul.mubr.f32.gmra.mxu0 %v601
        %v744 = vpop.f32.mrf.mxu0
        %v745 = vadd.f32 %v552, %v744
        %v746 = vpop.f32.mrf.mxu0
        %747 = vdwg.mxu0
        %v748 = vld [vmem:[%s4] sm:$0x1]
        %v750 = vlaneseq
        %v751 = vshrl.u32 %v750, 7
        %v752 = vsub.s32 0, %v751
        %v753 = vrot.slane %v748, %v752
        %v755 = vadd.f32 %v670, %v753
        %v756 = vadd.f32 %v675, %v753
        %v757 = vadd.f32 %v680, %v753
        %v758 = vadd.f32 %v685, %v753
        %v759 = vadd.f32 %v690, %v753
        %v760 = vadd.f32 %v695, %v753
        %v761 = vadd.f32 %v700, %v753
        %v762 = vadd.f32 %v705, %v753
        %v763 = vadd.f32 %v710, %v753
        %v764 = vadd.f32 %v715, %v753
        %v765 = vadd.f32 %v720, %v753
        %v766 = vadd.f32 %v725, %v753
        %v767 = vadd.f32 %v730, %v753
        %v768 = vadd.f32 %v735, %v753
        %v769 = vadd.f32 %v740, %v753
        %v770 = vadd.f32 %v745, %v753
        %v771 = vmax.f32 %v755, 0.0
        %v772 = vmax.f32 %v756, 0.0
        %v773 = vmax.f32 %v757, 0.0
        %v774 = vmax.f32 %v758, 0.0
        %v775 = vmax.f32 %v759, 0.0
        %v776 = vmax.f32 %v760, 0.0
        %v777 = vmax.f32 %v761, 0.0
        %v778 = vmax.f32 %v762, 0.0
        %v779 = vmax.f32 %v763, 0.0
        %v780 = vmax.f32 %v764, 0.0
        %v781 = vmax.f32 %v765, 0.0
        %v782 = vmax.f32 %v766, 0.0
        %v783 = vmax.f32 %v767, 0.0
        %v784 = vmax.f32 %v768, 0.0
        %v785 = vmax.f32 %v769, 0.0
        %v786 = vmax.f32 %v770, 0.0
        %v787 = vld [vmem:[%s5] sm:$0x1]
        %v789 = vlaneseq
        %v790 = vshrl.u32 %v789, 7
        %v791 = vsub.s32 0, %v790
        %v792 = vrot.slane %v787, %v791
        %v794 = vmul.f32 %v771, %v792
        %v795 = vmul.f32 %v772, %v792
        %v796 = vmul.f32 %v773, %v792
        %v797 = vmul.f32 %v774, %v792
        %v798 = vmul.f32 %v775, %v792
        %v799 = vmul.f32 %v776, %v792
        %v800 = vmul.f32 %v777, %v792
        %v801 = vmul.f32 %v778, %v792
        %v802 = vmul.f32 %v779, %v792
        %v803 = vmul.f32 %v780, %v792
        %v804 = vmul.f32 %v781, %v792
        %v805 = vmul.f32 %v782, %v792
        %v806 = vmul.f32 %v783, %v792
        %v807 = vmul.f32 %v784, %v792
        %v808 = vmul.f32 %v785, %v792
        %v809 = vmul.f32 %v786, %v792
        %v810 = vadd.f32 %v333, %v794
        %v811 = vadd.f32 %v334, %v795
        %v812 = vadd.f32 %v335, %v796
        %v813 = vadd.f32 %v336, %v797
        %v814 = vadd.f32 %v337, %v798
        %v815 = vadd.f32 %v338, %v799
        %v816 = vadd.f32 %v339, %v800
        %v817 = vadd.f32 %v340, %v801
        %v818 = vadd.f32 %v341, %v802
        %v819 = vadd.f32 %v342, %v803
        %v820 = vadd.f32 %v343, %v804
        %v821 = vadd.f32 %v344, %v805
        %v822 = vadd.f32 %v345, %v806
        %v823 = vadd.f32 %v346, %v807
        %v824 = vadd.f32 %v347, %v808
        %v825 = vadd.f32 %v348, %v809
        %s826 = sld [smem:[#allocation2]]
        %v827 = vstv %s826
        %v829 = vsel %vm361, 1.0, 0
        %v832 = vsel %vm361, %v810, 0
        %v835 = vsel %vm361, %v811, 0
        %v838 = vsel %vm361, %v812, 0
        %v841 = vsel %vm361, %v813, 0
        %v844 = vsel %vm361, %v814, 0
        %v847 = vsel %vm361, %v815, 0
        %v850 = vsel %vm361, %v816, 0
        %v853 = vsel %vm361, %v817, 0
        %v856 = vsel %vm361, %v818, 0
        %v859 = vsel %vm361, %v819, 0
        %v862 = vsel %vm361, %v820, 0
        %v865 = vsel %vm361, %v821, 0
        %v868 = vsel %vm361, %v822, 0
        %v871 = vsel %vm361, %v823, 0
        %v874 = vsel %vm361, %v824, 0
        %v877 = vsel %vm361, %v825, 0
        %879 = vmatprep.subr.mxu0 0.0
        %880 = vmatpush1.xpose.msra.mxu0 %v877
        %881 = vmatprep.subr.mxu0 0.0
        %882 = vmatpush1.xpose.msra.mxu0 %v874
        %883 = vmatprep.subr.mxu0 0.0
        %884 = vmatpush1.xpose.msra.mxu0 %v871
        %885 = vmatprep.subr.mxu0 0.0
        %886 = vmatpush1.xpose.msra.mxu0 %v868
        %887 = vmatprep.subr.mxu0 0.0
        %888 = vmatpush1.xpose.msra.mxu0 %v865
        %889 = vmatprep.subr.mxu0 0.0
        %890 = vmatpush1.xpose.msra.mxu0 %v862
        %891 = vmatprep.subr.mxu0 0.0
        %892 = vmatpush1.xpose.msra.mxu0 %v859
        %893 = vmatprep.subr.mxu0 0.0
        %894 = vmatpush1.xpose.msra.mxu0 %v856
        %895 = vmatprep.subr.mxu0 0.0
        %896 = vmatpush1.xpose.msra.mxu0 %v853
        %897 = vmatprep.subr.mxu0 0.0
        %898 = vmatpush1.xpose.msra.mxu0 %v850
        %899 = vmatprep.subr.mxu0 0.0
        %900 = vmatpush1.xpose.msra.mxu0 %v847
        %901 = vmatprep.subr.mxu0 0.0
        %902 = vmatpush1.xpose.msra.mxu0 %v844
        %903 = vmatprep.subr.mxu0 0.0
        %904 = vmatpush1.xpose.msra.mxu0 %v841
        %905 = vmatprep.subr.mxu0 0.0
        %906 = vmatpush1.xpose.msra.mxu0 %v838
        %907 = vmatprep.subr.mxu0 0.0
        %908 = vmatpush1.xpose.msra.mxu0 %v835
        %909 = vmatprep.subr.mxu0 0.0
        %910 = vmatpush1.xpose.msra.mxu0 %v832
        %911 = vmatprep.subr.mxu0 0.0
        %912 = vmatpush2.xpose.msra.mxu0 0.0
        %913 = vmatprep.subr.mxu0 0.0
        %914 = vmatpush2.xpose.msra.mxu0 0.0
        %915 = vmatprep.subr.mxu0 0.0
        %916 = vmatpush2.xpose.msra.mxu0 0.0
        %917 = vmatprep.subr.mxu0 0.0
        %918 = vmatpush2.xpose.msra.mxu0 0.0
        %919 = vmatprep.subr.mxu0 0.0
        %920 = vmatpush2.xpose.msra.mxu0 0.0
        %921 = vmatprep.subr.mxu0 0.0
        %922 = vmatpush2.xpose.msra.mxu0 0.0
        %923 = vmatprep.subr.mxu0 0.0
        %924 = vmatpush2.xpose.msra.mxu0 0.0
        %925 = vmatprep.subr.mxu0 0.0
        %926 = vmatpush2.xpose.msra.mxu0 0.0
        %927 = vmatprep.subr.mxu0 0.0
        %928 = vmatpush2.xpose.msra.mxu0 0.0
        %929 = vmatprep.subr.mxu0 0.0
        %930 = vmatpush2.xpose.msra.mxu0 0.0
        %931 = vmatprep.subr.mxu0 0.0
        %932 = vmatpush2.xpose.msra.mxu0 0.0
        %933 = vmatprep.subr.mxu0 0.0
        %934 = vmatpush2.xpose.msra.mxu0 0.0
        %935 = vmatprep.subr.mxu0 0.0
        %936 = vmatpush2.xpose.msra.mxu0 0.0
        %937 = vmatprep.subr.mxu0 0.0
        %938 = vmatpush2.xpose.msra.mxu0 0.0
        %939 = vmatprep.subr.mxu0 0.0
        %940 = vmatpush2.xpose.msra.mxu0 0.0
        %941 = vmatprep.subr.mxu0 0.0
        %942 = vmatpush2.xpose.msra.mxu0 0.0
        %943 = vmatprep.mubr.f32.mxu0 0.0
        %944 = vmatmul.mubr.f32.gmra.mxu0 %v829
        %v945 = vpop.f32.mrf.mxu0
        %v946 = vadd.f32 %v827, %v945
        %v947 = vpop.f32.mrf.mxu0
        %948 = vdwg.mxu0
        %949 = vst [vmem:[%s288] sm:$0x1] %v946
        %s950 = sand.u32 %s187, 1
        %s951 = scalar_lea.sflag [#allocation4], %s950
        %s952 = sand.u32 %s187, 1
        %s953 = scalar_lea.vmem [#allocation3], %s952
        // Predicated region
        $region49: #{tpu_custom_call.1} parent=47 // pred_check
          %p954 = pneg %p197
        $region50: #{tpu_custom_call.1} parent=47 // pred_check_branch
          %956 = sbr.rel (%p954) target = $region52
        $region51: #{tpu_custom_call.1} parent=47 // pred_region
          %s958 = ssub.s32 16, 16
          %959 = vsyncadd %s951, %s958
          %s960 = smul.addr %s22, 16
          %s961 = scalar_lea.hbm %s7, %s960
          %s963 = sshll.u32 %s953, 4
          %s964 = int_to_ptr.vmem [resolvable:$true] %s963
          %966 = dma.vmem_to_hbm [thread:$0]  %s964, 16, %s961, %s951
        $region52: #{tpu_custom_call.1} parent=47 // pred_fallthru
          _
      $region48: #{tpu_custom_call.1} parent=5 // pred_fallthru
        _
      %p967 = scmp.le.s32.totalorder 2, %s17
      // Predicated region
      $region53: #{tpu_custom_call.1} parent=5 // pred_check
        %p968 = pneg %p967
      $region54: #{tpu_custom_call.1} parent=5 // pred_check_branch
        %970 = sbr.rel (%p968) target = $region56
      $region55: #{tpu_custom_call.1} parent=5 // pred_region
        %s971 = ssub.s32 %s17, 2
        // Predicated region
        $region57: #{tpu_custom_call.1} parent=55 // pred_check
          %p972 = pneg %p203
        $region58: #{tpu_custom_call.1} parent=55 // pred_check_branch
          %974 = sbr.rel (%p972) target = $region60
        $region59: #{tpu_custom_call.1} parent=55 // pred_region
          %s975 = sand.u32 %s188, 1
          %s976 = scalar_lea.sflag [#allocation4], %s975
          %s977 = sand.u32 %s188, 1
          %s978 = scalar_lea.vmem [#allocation3], %s977
          %979 = dma.done %s976, 16
        $region60: #{tpu_custom_call.1} parent=55 // pred_fallthru
          _
      $region56: #{tpu_custom_call.1} parent=5 // pred_fallthru
        _
    $region6: #{tpu_custom_call.1} parent=1 // loop_footer
      %s21 = sadd.s32 1, %s17
    $region7: #{tpu_custom_call.1} parent=1 // loop_footer_branch
      %16 = sbr.rel target = $region3
    $region8: #{tpu_custom_call.1} parent=1 // loop_exit
      _
    %980 = vsyncpa [#allocation4], 1
    %s981 = scalar_lea.sflag [#allocation4], 1
    %982 = vsyncpa %s981, 1

</llo_original>
